<compile_context>
chip_gen: v7x
topology: tpu7x:2x2x1
jax: 0.10.0
libtpu: 0.0.40
codegen_flags: <defaults>
</compile_context>

<pallas_src>
import functools
import math

import jax
import jax.numpy as jnp
from jax.experimental import pallas as pl
from jax.experimental.pallas import tpu as pltpu


# ----------------------------- kernels ------------------------------------ #

def _seg_enc_eval_kernel(x_ref, emb_ref, o_ref):
    """o = x + emb (broadcast over rows).  Dropout is identity in eval."""
    o_ref[...] = (x_ref[...] + emb_ref[...]).astype(o_ref.dtype)


def _seg_enc_dropout_kernel(x_ref, emb_ref, bits_ref, o_ref, *,
                            keep_threshold: int, inv_keep: float):
    """o = dropout(x + emb): keep iff bits < threshold, scale kept by 1/keep_p."""
    y = x_ref[...] + emb_ref[...]                       # (TM, W)
    keep = bits_ref[...] < jnp.uint32(keep_threshold)   # uint32 compare, no casts
    scale = jnp.array(inv_keep, dtype=y.dtype)
    o_ref[...] = jnp.where(keep, y * scale, jnp.zeros_like(y)).astype(o_ref.dtype)


# --------------------------- tiling helpers -------------------------------- #

_BLOCK_BYTE_CAP = 8 * 1024 * 1024      # per-input-block cap (85%-roofline regime)


def _vmem_capacity_bytes() -> int:
    try:
        return int(pltpu.get_tpu_info().vmem_capacity_bytes)
    except Exception:
        return 64 << 20                # conservative: v7x per-TensorCore VMEM


def _lane_group(emb_size: int, total_rows: int) -> int:
    """Rows packed per lane-dense output row so last dim is a multiple of 128."""
    if emb_size % 128 == 0:
        return 1
    g = 128 // math.gcd(emb_size, 128)
    return g if (total_rows % g == 0) else 1


def _tile_rows(rows: int, width: int, per_row_stream_bytes: int,
               x_itemsize: int, stream_budget: int) -> int:
    """Largest row-tile that keeps double-buffered streams within budget."""
    cap_budget = stream_budget // (2 * per_row_stream_bytes)      # 2x: double buffer
    cap_block = _BLOCK_BYTE_CAP // max(width * x_itemsize, 1)
    tm = int(min(cap_budget, cap_block))
    tm = max(8, (tm // 8) * 8)                                    # sublane multiple
    return rows if tm >= rows else tm


# ------------------------------ wrapper ------------------------------------ #

def segment_encoding(token_embedding: jax.Array,
                     embedding: jax.Array,
                     *,
                     dropout_rate: float = 0.0,
                     training: bool = False,
                     rng_key: jax.Array | None = None) -> jax.Array:
    """Pallas implementation of SegmentEncoding.forward.

    token_embedding: (B, S, E)
    embedding:       (1, 1, E)   (the nn.Parameter)
    """
    B, S, E = token_embedding.shape
    dtype = token_embedding.dtype
    itemsize = jnp.dtype(dtype).itemsize
    rows_total = B * S

    apply_dropout = bool(training) and float(dropout_rate) > 0.0

    # Lane-dense flattening: (B, S, E) -> (R, W) with W a multiple of 128 when
    # possible; the emb row is tiled to match.
    g = _lane_group(E, rows_total)
    W = g * E
    R = rows_total // g
    x2 = token_embedding.reshape(R, W)
    emb_row = jnp.tile(embedding.reshape(1, E).astype(dtype), (1, g))   # (1, W)

    # VMEM-budgeted row tile (double-buffered x [+ bits] + out).
    vmem_cap = _vmem_capacity_bytes()
    vmem_limit = min(vmem_cap * 3 // 4, vmem_cap - (8 << 20))
    stream_budget = max(vmem_limit - (4 << 20), 8 << 20)
    per_row_bytes = W * (2 * itemsize + (4 if apply_dropout else 0))
    TM = _tile_rows(R, W, per_row_bytes, itemsize, stream_budget)

    grid = (pl.cdiv(R, TM),)
    x_spec = pl.BlockSpec((TM, W), lambda i: (i, 0))
    emb_spec = pl.BlockSpec((1, W), lambda i: (0, 0))
    out_spec = pl.BlockSpec((TM, W), lambda i: (i, 0))
    cparams = pltpu.CompilerParams(
        dimension_semantics=("parallel",),      # feeds both v7x TensorCores
        vmem_limit_bytes=int(vmem_limit),
    )
    out_shape2 = jax.ShapeDtypeStruct((R, W), dtype)

    if apply_dropout:
        keep_prob = 1.0 - float(dropout_rate)
        if keep_prob <= 0.0:
            keep_threshold, inv_keep = 0, 0.0          # drop everything
        else:
            keep_threshold = min(int(round(keep_prob * (1 << 32))), (1 << 32) - 1)
            inv_keep = 1.0 / keep_prob
        if rng_key is None:
            rng_key = jax.random.PRNGKey(0)
        bits = jax.random.bits(rng_key, (R, W), dtype=jnp.uint32)

        kernel = functools.partial(_seg_enc_dropout_kernel,
                                   keep_threshold=keep_threshold,
                                   inv_keep=inv_keep)
        out2 = pl.pallas_call(
            kernel,
            out_shape=out_shape2,
            grid=grid,
            in_specs=[x_spec, emb_spec, pl.BlockSpec((TM, W), lambda i: (i, 0))],
            out_specs=out_spec,
            compiler_params=cparams,
        )(x2, emb_row, bits)
    else:
        out2 = pl.pallas_call(
            _seg_enc_eval_kernel,
            out_shape=out_shape2,
            grid=grid,
            in_specs=[x_spec, emb_spec],
            out_specs=out_spec,
            compiler_params=cparams,
        )(x2, emb_row)

    return out2.reshape(B, S, E)


# ------------------------------- demo -------------------------------------- #

if __name__ == "__main__":
    # Small shapes consistent with the module: (batch, seq, emb_size)
    B, S, E = 2, 8, 32
    dropout = 0.1

    key = jax.random.PRNGKey(0)
    k_x, k_emb, k_drop = jax.random.split(key, 3)

    token_embedding = jax.random.normal(k_x, (B, S, E), dtype=jnp.float32)
    # Deterministic stand-in for the torch.randn((1, 1, emb_size)) parameter.
    embedding_param = jax.random.normal(k_emb, (1, 1, E), dtype=jnp.float32)

    # Eval-mode forward (dropout is identity) -- deterministic, check vs. ref.
    out_eval = segment_encoding(token_embedding, embedding_param,
                                dropout_rate=dropout, training=False)
    out_eval = jax.block_until_ready(out_eval)
    ref = token_embedding + embedding_param          # broadcast add
    assert out_eval.shape == (B, S, E)
    assert jnp.allclose(out_eval, ref, atol=1e-6, rtol=1e-6)

    # Train-mode forward exercises the dropout path.
    out_train = segment_encoding(token_embedding, embedding_param,
                                 dropout_rate=dropout, training=True,
                                 rng_key=k_drop)
    out_train = jax.block_until_ready(out_train)
    assert out_train.shape == (B, S, E)
    # Every element is either dropped (0) or kept and scaled by 1/(1-p).
    scaled_ref = ref / (1.0 - dropout)
    ok = jnp.isclose(out_train, 0.0) | jnp.isclose(out_train, scaled_ref,
                                                   atol=1e-5, rtol=1e-5)
    assert bool(jnp.all(ok))

    print("KERNEL_OK")
</pallas_src>

<mosaic_0001>
module attributes {stable_mosaic.version = 11 : i64} {
  func.func @_seg_enc_eval_kernel(%arg0: i32, %arg1: memref<4x128xf32, #tpu.memory_space<vmem>>, %arg2: memref<1x128xf32, #tpu.memory_space<vmem>>, %arg3: memref<4x128xf32, #tpu.memory_space<vmem>>) attributes {dimension_semantics = [#tpu.dimension_semantics<parallel>], iteration_bounds = array<i64: 1>, scalar_prefetch = 0 : i64, scratch_operands = 0 : i64, tpu.core_type = #tpu.core_type<tc>, window_params = [{transform_indices = @transform_0, window_bounds = array<i64: 4, 128>}, {pipeline_mode = #tpu.pipeline_mode<synchronous>, transform_indices = @transform_1, window_bounds = array<i64: 1, 128>}, {transform_indices = @transform_2, window_bounds = array<i64: 4, 128>}]} {
    %c0 = arith.constant 0 : index
    %c0_0 = arith.constant 0 : index
    %0 = vector.load %arg1[%c0, %c0_0] : memref<4x128xf32, #tpu.memory_space<vmem>>, vector<4x128xf32>
    %c0_1 = arith.constant 0 : index
    %c0_2 = arith.constant 0 : index
    %1 = vector.load %arg2[%c0_1, %c0_2] : memref<1x128xf32, #tpu.memory_space<vmem>>, vector<1x128xf32>
    %2 = vector.broadcast %1 : vector<1x128xf32> to vector<4x128xf32>
    %3 = arith.addf %0, %2 : vector<4x128xf32>
    %c0_3 = arith.constant 0 : index
    %c0_4 = arith.constant 0 : index
    %4 = vector.load %arg3[%c0_3, %c0_4] : memref<4x128xf32, #tpu.memory_space<vmem>>, vector<4x128xf32>
    tpu.vector_store %arg3[%c0_3, %c0_4], %3 {strides = array<i32>} : memref<4x128xf32, #tpu.memory_space<vmem>>, vector<4x128xf32>,
    return
  }
  func.func @transform_0(%arg0: i32) -> (i32, i32) {
    %c0_i32 = arith.constant 0 : i32
    %c0_i32_0 = arith.constant 0 : i32
    return %arg0, %c0_i32 : i32, i32
  }
  func.func @transform_1(%arg0: i32) -> (i32, i32) {
    %c0_i32 = arith.constant 0 : i32
    %c0_i32_0 = arith.constant 0 : i32
    %c0_i32_1 = arith.constant 0 : i32
    return %c0_i32, %c0_i32_0 : i32, i32
  }
  func.func @transform_2(%arg0: i32) -> (i32, i32) {
    %c0_i32 = arith.constant 0 : i32
    %c0_i32_0 = arith.constant 0 : i32
    return %arg0, %c0_i32 : i32, i32
  }
}

</mosaic_0001>

<llo_original>
// kernel: tpu_custom_call.1
$region0: #{tpu_custom_call.1}
  #allocation0 [shape = 'u32[]', space=smem, size = 0x4, offset = 0x4, fixed_abs, tag = 'smem constant byte address 0x4 - core index']
  #allocation1 [shape = 'u32[144,128]{1,0:T(1,128)}', space=vmem, size = 0x12000, scoped, tag = 'internal scratch']
  %s0 = inlined_call_operand.hbm [shape: f32[4,128], index: 0, kind: input, shape index: {}]
  %s1 = inlined_call_operand.vmem [shape: f32[1,128], index: 1, kind: input, shape index: {}]
  %s2 = inlined_call_operand.hbm [shape: f32[4,128], index: 2, kind: output, shape index: {}]
  %s3 = sld [smem:[#allocation0]]
  $region22: #{tpu_custom_call.1} parent=0
    _
  %s5 = ssub.s32 1, %s3
  %s6 = scalar_select 0, %s5, %s3
  $region1: #{tpu_custom_call.1} parent=0
    #allocation2 [shape = 'u8[2048]{0}', space=vmem, size = 0x800, scoped, tag = 'input window, operand 0, single buffered']
    #allocation3 [shape = 's32[1]{0}', space=sflag, size = 0x4, scoped, tag = 'scoped memory for tpu_custom_call.1']
    #allocation4 [shape = 's32[1]{0}', space=sflag, size = 0x4, scoped, tag = 'scoped memory for tpu_custom_call.1']
    #allocation5 [shape = 'u8[2048]{0}', space=vmem, size = 0x800, scoped, tag = 'output window, operand 0, single buffered']
    %7 = vsyncpa [#allocation3], 0
    %8 = vsyncpa [#allocation4], 0
    // Predicated region
    $region2: #{tpu_custom_call.1} parent=1 // pred_check
      _
    $region3: #{tpu_custom_call.1} parent=1 // pred_check_branch
      %10 = sbr.rel (0) target = $region5
    $region4: #{tpu_custom_call.1} parent=1 // pred_region
      %s12 = ssub.s32 64, 64
      %13 = vsyncadd [#allocation3], %s12
      %s15 = sshll.u32 [#allocation2], 4
      %s16 = int_to_ptr.vmem [resolvable:$true] %s15
      %18 = dma.hbm_to_vmem [thread:$0]  %s0, 64, %s16, [#allocation3]
    $region5: #{tpu_custom_call.1} parent=1 // pred_fallthru
      _
    // Predicated region
    $region6: #{tpu_custom_call.1} parent=1 // pred_check
      _
    $region7: #{tpu_custom_call.1} parent=1 // pred_check_branch
      %20 = sbr.rel (0) target = $region9
    $region8: #{tpu_custom_call.1} parent=1 // pred_region
      _
    $region9: #{tpu_custom_call.1} parent=1 // pred_fallthru
      _
    // Predicated region
    $region10: #{tpu_custom_call.1} parent=1 // pred_check
      _
    $region11: #{tpu_custom_call.1} parent=1 // pred_check_branch
      %22 = sbr.rel (0) target = $region13
    $region12: #{tpu_custom_call.1} parent=1 // pred_region
      %23 = dma.done [#allocation3], 64
    $region13: #{tpu_custom_call.1} parent=1 // pred_fallthru
      _
    %v24 = vld [vmem:[#allocation2] sm:$0xf]
    %v25 = vld [vmem:[%s1] sm:$0x1]
    %v27 = vlaneseq
    %v28 = vshrl.u32 %v27, 7
    %v29 = vsub.s32 0, %v28
    %v30 = vrot.slane %v25, %v29
    %v32 = vadd.f32 %v24, %v30
    %33 = vst [vmem:[#allocation5] sm:$0xf] %v32
    // Predicated region
    $region14: #{tpu_custom_call.1} parent=1 // pred_check
      _
    $region15: #{tpu_custom_call.1} parent=1 // pred_check_branch
      %35 = sbr.rel (0) target = $region17
    $region16: #{tpu_custom_call.1} parent=1 // pred_region
      %s37 = ssub.s32 64, 64
      %38 = vsyncadd [#allocation4], %s37
      %s40 = sshll.u32 [#allocation5], 4
      %s41 = int_to_ptr.vmem [resolvable:$true] %s40
      %43 = dma.vmem_to_hbm [thread:$0]  %s41, 64, %s2, [#allocation4]
    $region17: #{tpu_custom_call.1} parent=1 // pred_fallthru
      _
    // Predicated region
    $region18: #{tpu_custom_call.1} parent=1 // pred_check
      _
    $region19: #{tpu_custom_call.1} parent=1 // pred_check_branch
      %45 = sbr.rel (0) target = $region21
    $region20: #{tpu_custom_call.1} parent=1 // pred_region
      %46 = dma.done [#allocation4], 64
    $region21: #{tpu_custom_call.1} parent=1 // pred_fallthru
      _
    %47 = vsyncpa [#allocation3], 1
    %48 = vsyncpa [#allocation4], 1

</llo_original>
